<compile_context>
chip_gen: v5e
topology: v5e:2x2
jax: 0.10.0
libtpu: 0.0.40
codegen_flags: <defaults>
</compile_context>

<pallas_src>
import functools

import jax
import jax.numpy as jnp
import numpy as np
from jax import lax
from jax.experimental import pallas as pl
from jax.experimental.pallas import tpu as pltpu

_EPS = 1e-5


def _convreg_kernel(x_ref, w1t_ref, w23_ref, bn_ref, mask_ref, o_ref,
                    *, N, H, W, use_relu):
    HW = H * W
    NHW = N * HW

    bn = bn_ref[...]          # (6, Co, 1): [g1, be1, g2, be2, g3, be3]
    w23 = w23_ref[...]        # (6, Co, 3*Co): conv2 dx=-1,0,+1 columns, then conv3
    masks = mask_ref[...]     # (4, NHW) f32 0/1
    m_up, m_dn = masks[0:1], masks[1:2]     # dy = -1 / +1 validity (h-1 / h+1 in range)
    m_lf, m_rt = masks[2:3], masks[3:4]     # dx = -1 / +1 validity (w-1 / w+1 in range)

    def bn_act(y, k):
        # Training-mode BatchNorm per channel (sublane row) over the N*H*W lane axis.
        # E[y] and E[y^2] are independent reductions; affine is folded to scale/shift.
        mean = jnp.mean(y, axis=1, keepdims=True)
        msq = jnp.mean(y * y, axis=1, keepdims=True)
        var = msq - mean * mean
        scale = bn[2 * k] * lax.rsqrt(var + _EPS)
        shift = bn[2 * k + 1] - mean * scale
        out = y * scale + shift
        return jnp.maximum(out, 0.0) if use_relu else out

    # ---- assemble the (Ci, N*HW) lane-dense activation slab (images side by side) ----
    x = x_ref[...]                                                    # (N, Ci, HW)
    x2d = jnp.concatenate([x[n] for n in range(N)], axis=1)          # (Ci, NHW)

    # ---- conv1: 1x1 conv == channel matmul (MXU); bias cancelled by BN ----
    y = bn_act(jnp.dot(w1t_ref[...], x2d, preferred_element_type=jnp.float32), 0)

    def conv3x3(y2d, wk):
        # Grouped-tap im2col:
        #   z_dy[p] = mask_dy[p] * y[p + dy*W]        (2 rolls + 2 mask muls)
        #   partial_dx = Wcol_dx @ [z_-1; z_0; z_+1]  (3 MXU matmuls, K = 3*Co)
        #   out[p]    = sum_dx mask_dx[p] * partial_dx[p + dx]  (2 rolls + 2 mask muls)
        z_up = m_up * pltpu.roll(y2d, W, axis=1)             # z[p] = y[p - W]  (dy = -1)
        z_dn = m_dn * pltpu.roll(y2d, NHW - W, axis=1)       # z[p] = y[p + W]  (dy = +1)
        patch = jnp.concatenate([z_up, y2d, z_dn], axis=0)   # (3*Co, NHW)
        p_lf = jnp.dot(w23[wk + 0], patch, preferred_element_type=jnp.float32)
        p_ct = jnp.dot(w23[wk + 1], patch, preferred_element_type=jnp.float32)
        p_rt = jnp.dot(w23[wk + 2], patch, preferred_element_type=jnp.float32)
        return (p_ct
                + m_lf * pltpu.roll(p_lf, 1, axis=1)          # out[p] += p_lf[p - 1] (dx=-1)
                + m_rt * pltpu.roll(p_rt, NHW - 1, axis=1))   # out[p] += p_rt[p + 1] (dx=+1)

    y = bn_act(conv3x3(y, 0), 1)     # conv_2 + bn2 (+relu)
    y = bn_act(conv3x3(y, 3), 2)     # conv_3 + bn3 (+relu)

    # ---- split the (Co, N*HW) slab back to (N, Co, HW): 128-aligned lane-dense stores ----
    for n in range(N):
        o_ref[n, :, :] = y[:, n * HW:(n + 1) * HW]


@functools.partial(jax.jit, static_argnames=("use_relu",))
def conv_reg_forward(x_nchw, params, use_relu=True):
    """ConvReg forward. x_nchw: (N, s_C, H, W) float32 -> (N, t_C, H, W) float32."""
    N, Ci, H, W = x_nchw.shape
    Co = params["w1"].shape[1]
    HW = H * W

    # NCHW -> (N, Ci, H*W): free reshape, no transpose / HBM round-trip.
    x3d = x_nchw.reshape(N, Ci, HW).astype(jnp.float32)

    # Pre-packed weights: (Co, Ci) for the 1x1 conv; for each 3x3 conv one (Co, 3*Co)
    # column block per dx in {-1,0,+1}, rows ordered [dy=-1 | dy=0 | dy=+1] to match the
    # in-kernel patch stacking. Conv biases b1/b2/b3 are intentionally NOT passed: the
    # training-mode BatchNorm subtracts the batch mean, cancelling them exactly.
    w1t = jnp.transpose(params["w1"], (1, 0))                                # (Co, Ci)

    def group_cols(w_hwio):  # (3,3,Co,Co) HWIO -> (3, Co, 3*Co): [dx_blk, o, dy_blk*Ci + i]
        return jnp.transpose(w_hwio, (1, 3, 0, 2)).reshape(3, Co, 3 * Co)

    w23 = jnp.concatenate([group_cols(params["w2"]), group_cols(params["w3"])], axis=0)
    bn = jnp.stack([params[k].reshape(Co, 1) for k in
                    ("g1", "be1", "g2", "be2", "g3", "be3")], axis=0)         # (6, Co, 1)

    # 0/1 boundary masks over the flattened n*HW + h*W + w axis (constant-folded by XLA).
    hw = np.arange(HW)
    hh, ww = hw // W, hw % W
    masks_np = np.stack([hh >= 1, hh <= H - 2, ww >= 1, ww <= W - 2]).astype(np.float32)
    masks = jnp.asarray(np.tile(masks_np, (1, N)))                            # (4, N*HW)

    out3d = pl.pallas_call(
        functools.partial(_convreg_kernel, N=N, H=H, W=W, use_relu=use_relu),
        out_shape=jax.ShapeDtypeStruct((N, Co, HW), jnp.float32),
        in_specs=[pl.BlockSpec(memory_space=pltpu.MemorySpace.VMEM)] * 5,
        out_specs=pl.BlockSpec(memory_space=pltpu.MemorySpace.VMEM),
    )(x3d, w1t, w23, bn, masks)

    # (N, Co, H*W) -> NCHW: free reshape.
    return out3d.reshape(N, Co, H, W)


def ref_forward(x_nchw, p, use_relu=True):
    """Pure-JAX reference (lax.conv) matching the PyTorch module semantics."""
    dn = ("NHWC", "HWIO", "NHWC")

    def bn_act(y, g, b):
        mean = y.mean(axis=(0, 1, 2), keepdims=True)
        var = ((y - mean) ** 2).mean(axis=(0, 1, 2), keepdims=True)
        out = (y - mean) * lax.rsqrt(var + _EPS) * g + b
        return jnp.maximum(out, 0.0) if use_relu else out

    x = jnp.transpose(x_nchw, (0, 2, 3, 1))
    Ci, Co = p["w1"].shape
    y = lax.conv_general_dilated(x, p["w1"].reshape(1, 1, Ci, Co), (1, 1), "VALID",
                                 dimension_numbers=dn) + p["b1"]
    y = bn_act(y, p["g1"], p["be1"])
    y = lax.conv_general_dilated(y, p["w2"], (1, 1), "SAME", dimension_numbers=dn) + p["b2"]
    y = bn_act(y, p["g2"], p["be2"])
    y = lax.conv_general_dilated(y, p["w3"], (1, 1), "SAME", dimension_numbers=dn) + p["b3"]
    y = bn_act(y, p["g3"], p["be3"])
    return jnp.transpose(y, (0, 3, 1, 2))


def init_params(key, s_C, t_C):
    ks = jax.random.split(key, 12)
    f32 = jnp.float32
    return dict(
        w1=0.2 * jax.random.normal(ks[0], (s_C, t_C), f32),        # 1x1 conv, (Cin, Cout)
        b1=0.1 * jax.random.normal(ks[1], (1, t_C), f32),
        g1=1.0 + 0.1 * jax.random.normal(ks[2], (1, t_C), f32),
        be1=0.1 * jax.random.normal(ks[3], (1, t_C), f32),
        w2=0.1 * jax.random.normal(ks[4], (3, 3, t_C, t_C), f32),  # HWIO
        b2=0.1 * jax.random.normal(ks[5], (1, t_C), f32),
        g2=1.0 + 0.1 * jax.random.normal(ks[6], (1, t_C), f32),
        be2=0.1 * jax.random.normal(ks[7], (1, t_C), f32),
        w3=0.1 * jax.random.normal(ks[8], (3, 3, t_C, t_C), f32),  # HWIO
        b3=0.1 * jax.random.normal(ks[9], (1, t_C), f32),
        g3=1.0 + 0.1 * jax.random.normal(ks[10], (1, t_C), f32),
        be3=0.1 * jax.random.normal(ks[11], (1, t_C), f32),
    )


if __name__ == "__main__":
    key = jax.random.PRNGKey(0)
    k_param, k_x = jax.random.split(key)

    N, s_C, H, W = 2, 4, 16, 16   # student feature shape (NCHW)
    t_C = 8                       # teacher channels; teacher spatial == student spatial

    params = init_params(k_param, s_C, t_C)
    x = jax.random.normal(k_x, (N, s_C, H, W), jnp.float32)

    out = jax.block_until_ready(conv_reg_forward(x, params, use_relu=True))
    ref = jax.block_until_ready(ref_forward(x, params, use_relu=True))

    assert out.shape == (N, t_C, H, W), out.shape
    np.testing.assert_allclose(np.asarray(out), np.asarray(ref), rtol=2e-2, atol=2e-2)
    print("KERNEL_OK")
</pallas_src>

<mosaic_0001>
module attributes {stable_mosaic.version = 11 : i64} {
  func.func @_convreg_kernel(%arg0: memref<2x4x256xf32, #tpu.memory_space<vmem>>, %arg1: memref<8x4xf32, #tpu.memory_space<vmem>>, %arg2: memref<6x8x24xf32, #tpu.memory_space<vmem>>, %arg3: memref<6x8x1xf32, #tpu.memory_space<vmem>>, %arg4: memref<4x512xf32, #tpu.memory_space<vmem>>, %arg5: memref<2x8x256xf32, #tpu.memory_space<vmem>>) attributes {dimension_semantics = [], scalar_prefetch = 0 : i64, scratch_operands = 0 : i64, tpu.core_type = #tpu.core_type<tc>} {
    %c0 = arith.constant 0 : index
    %c0_0 = arith.constant 0 : index
    %c0_1 = arith.constant 0 : index
    %0 = vector.load %arg3[%c0, %c0_0, %c0_1] : memref<6x8x1xf32, #tpu.memory_space<vmem>>, vector<6x8x1xf32>
    %c0_2 = arith.constant 0 : index
    %c0_3 = arith.constant 0 : index
    %c0_4 = arith.constant 0 : index
    %1 = vector.load %arg2[%c0_2, %c0_3, %c0_4] : memref<6x8x24xf32, #tpu.memory_space<vmem>>, vector<6x8x24xf32>
    %c0_5 = arith.constant 0 : index
    %c0_6 = arith.constant 0 : index
    %2 = vector.load %arg4[%c0_5, %c0_6] : memref<4x512xf32, #tpu.memory_space<vmem>>, vector<4x512xf32>
    %3 = vector.extract_strided_slice %2 {offsets = [0, 0], sizes = [1, 512], strides = [1, 1]} : vector<4x512xf32> to vector<1x512xf32>
    %4 = vector.extract_strided_slice %2 {offsets = [1, 0], sizes = [1, 512], strides = [1, 1]} : vector<4x512xf32> to vector<1x512xf32>
    %5 = vector.extract_strided_slice %2 {offsets = [2, 0], sizes = [1, 512], strides = [1, 1]} : vector<4x512xf32> to vector<1x512xf32>
    %6 = vector.extract_strided_slice %2 {offsets = [3, 0], sizes = [1, 512], strides = [1, 1]} : vector<4x512xf32> to vector<1x512xf32>
    %c0_7 = arith.constant 0 : index
    %c0_8 = arith.constant 0 : index
    %c0_9 = arith.constant 0 : index
    %7 = vector.load %arg0[%c0_7, %c0_8, %c0_9] : memref<2x4x256xf32, #tpu.memory_space<vmem>>, vector<2x4x256xf32>
    %8 = vector.extract_strided_slice %7 {offsets = [0, 0, 0], sizes = [1, 4, 256], strides = [1, 1, 1]} : vector<2x4x256xf32> to vector<1x4x256xf32>
    %9 = vector.shape_cast %8 : vector<1x4x256xf32> to vector<4x256xf32>
    %10 = vector.extract_strided_slice %7 {offsets = [1, 0, 0], sizes = [1, 4, 256], strides = [1, 1, 1]} : vector<2x4x256xf32> to vector<1x4x256xf32>
    %11 = vector.shape_cast %10 : vector<1x4x256xf32> to vector<4x256xf32>
    %12 = tpu.concatenate %9, %11 in 1 : vector<4x256xf32>, vector<4x256xf32> -> vector<4x512xf32>
    %c0_10 = arith.constant 0 : index
    %c0_11 = arith.constant 0 : index
    %13 = vector.load %arg1[%c0_10, %c0_11] : memref<8x4xf32, #tpu.memory_space<vmem>>, vector<8x4xf32>
    %cst = arith.constant dense<0.000000e+00> : vector<8x512xf32>
    %14 = tpu.matmul %13, %12, %cst {dimension_numbers = #tpu.dot_dimension_numbers<[1], [0], [0], [1], [0, 0, 1, 1], [], []>} : vector<8x4xf32>, vector<4x512xf32>, vector<8x512xf32> -> vector<8x512xf32>
    %cst_12 = arith.constant dense<0.000000e+00> : vector<8xf32>
    %15 = vector.multi_reduction <add>, %14, %cst_12 [1] : vector<8x512xf32> to vector<8xf32>
    %16 = vector.shape_cast %15 : vector<8xf32> to vector<8x1xf32>
    %cst_13 = arith.constant 5.120000e+02 : f32
    %17 = vector.broadcast %cst_13 : f32 to vector<8x1xf32>
    %18 = arith.divf %16, %17 : vector<8x1xf32>
    %19 = arith.mulf %14, %14 : vector<8x512xf32>
    %cst_14 = arith.constant dense<0.000000e+00> : vector<8xf32>
    %20 = vector.multi_reduction <add>, %19, %cst_14 [1] : vector<8x512xf32> to vector<8xf32>
    %21 = vector.shape_cast %20 : vector<8xf32> to vector<8x1xf32>
    %cst_15 = arith.constant 5.120000e+02 : f32
    %22 = vector.broadcast %cst_15 : f32 to vector<8x1xf32>
    %23 = arith.divf %21, %22 : vector<8x1xf32>
    %24 = arith.mulf %18, %18 : vector<8x1xf32>
    %25 = arith.subf %23, %24 : vector<8x1xf32>
    %26 = vector.extract_strided_slice %0 {offsets = [0, 0, 0], sizes = [1, 8, 1], strides = [1, 1, 1]} : vector<6x8x1xf32> to vector<1x8x1xf32>
    %27 = vector.shape_cast %26 : vector<1x8x1xf32> to vector<8x1xf32>
    %cst_16 = arith.constant 9.99999974E-6 : f32
    %28 = vector.broadcast %cst_16 : f32 to vector<8x1xf32>
    %29 = arith.addf %25, %28 : vector<8x1xf32>
    %30 = math.rsqrt %29 : vector<8x1xf32>
    %31 = arith.mulf %27, %30 : vector<8x1xf32>
    %32 = vector.extract_strided_slice %0 {offsets = [1, 0, 0], sizes = [1, 8, 1], strides = [1, 1, 1]} : vector<6x8x1xf32> to vector<1x8x1xf32>
    %33 = vector.shape_cast %32 : vector<1x8x1xf32> to vector<8x1xf32>
    %34 = arith.mulf %18, %31 : vector<8x1xf32>
    %35 = arith.subf %33, %34 : vector<8x1xf32>
    %36 = vector.broadcast %31 : vector<8x1xf32> to vector<8x512xf32>
    %37 = arith.mulf %14, %36 : vector<8x512xf32>
    %38 = vector.broadcast %35 : vector<8x1xf32> to vector<8x512xf32>
    %39 = arith.addf %37, %38 : vector<8x512xf32>
    %cst_17 = arith.constant 0.000000e+00 : f32
    %40 = vector.broadcast %cst_17 : f32 to vector<8x512xf32>
    %41 = arith.maximumf %39, %40 : vector<8x512xf32>
    %c16_i32 = arith.constant 16 : i32
    %42 = tpu.dynamic_rotate %41 by %c16_i32 dim 1 : vector<8x512xf32>, i32 -> vector<8x512xf32>
    %43 = vector.broadcast %3 : vector<1x512xf32> to vector<8x512xf32>
    %44 = arith.mulf %43, %42 : vector<8x512xf32>
    %c496_i32 = arith.constant 496 : i32
    %45 = tpu.dynamic_rotate %41 by %c496_i32 dim 1 : vector<8x512xf32>, i32 -> vector<8x512xf32>
    %46 = vector.broadcast %4 : vector<1x512xf32> to vector<8x512xf32>
    %47 = arith.mulf %46, %45 : vector<8x512xf32>
    %48 = tpu.concatenate %44, %41, %47 in 0 : vector<8x512xf32>, vector<8x512xf32>, vector<8x512xf32> -> vector<24x512xf32>
    %49 = vector.extract_strided_slice %1 {offsets = [0, 0, 0], sizes = [1, 8, 24], strides = [1, 1, 1]} : vector<6x8x24xf32> to vector<1x8x24xf32>
    %50 = vector.shape_cast %49 : vector<1x8x24xf32> to vector<8x24xf32>
    %cst_18 = arith.constant dense<0.000000e+00> : vector<8x512xf32>
    %51 = tpu.matmul %50, %48, %cst_18 {dimension_numbers = #tpu.dot_dimension_numbers<[1], [0], [0], [1], [0, 0, 1, 1], [], []>} : vector<8x24xf32>, vector<24x512xf32>, vector<8x512xf32> -> vector<8x512xf32>
    %52 = vector.extract_strided_slice %1 {offsets = [1, 0, 0], sizes = [1, 8, 24], strides = [1, 1, 1]} : vector<6x8x24xf32> to vector<1x8x24xf32>
    %53 = vector.shape_cast %52 : vector<1x8x24xf32> to vector<8x24xf32>
    %cst_19 = arith.constant dense<0.000000e+00> : vector<8x512xf32>
    %54 = tpu.matmul %53, %48, %cst_19 {dimension_numbers = #tpu.dot_dimension_numbers<[1], [0], [0], [1], [0, 0, 1, 1], [], []>} : vector<8x24xf32>, vector<24x512xf32>, vector<8x512xf32> -> vector<8x512xf32>
    %55 = vector.extract_strided_slice %1 {offsets = [2, 0, 0], sizes = [1, 8, 24], strides = [1, 1, 1]} : vector<6x8x24xf32> to vector<1x8x24xf32>
    %56 = vector.shape_cast %55 : vector<1x8x24xf32> to vector<8x24xf32>
    %cst_20 = arith.constant dense<0.000000e+00> : vector<8x512xf32>
    %57 = tpu.matmul %56, %48, %cst_20 {dimension_numbers = #tpu.dot_dimension_numbers<[1], [0], [0], [1], [0, 0, 1, 1], [], []>} : vector<8x24xf32>, vector<24x512xf32>, vector<8x512xf32> -> vector<8x512xf32>
    %c1_i32 = arith.constant 1 : i32
    %58 = tpu.dynamic_rotate %51 by %c1_i32 dim 1 : vector<8x512xf32>, i32 -> vector<8x512xf32>
    %59 = vector.broadcast %5 : vector<1x512xf32> to vector<8x512xf32>
    %60 = arith.mulf %59, %58 : vector<8x512xf32>
    %61 = arith.addf %54, %60 : vector<8x512xf32>
    %c511_i32 = arith.constant 511 : i32
    %62 = tpu.dynamic_rotate %57 by %c511_i32 dim 1 : vector<8x512xf32>, i32 -> vector<8x512xf32>
    %63 = vector.broadcast %6 : vector<1x512xf32> to vector<8x512xf32>
    %64 = arith.mulf %63, %62 : vector<8x512xf32>
    %65 = arith.addf %61, %64 : vector<8x512xf32>
    %cst_21 = arith.constant dense<0.000000e+00> : vector<8xf32>
    %66 = vector.multi_reduction <add>, %65, %cst_21 [1] : vector<8x512xf32> to vector<8xf32>
    %67 = vector.shape_cast %66 : vector<8xf32> to vector<8x1xf32>
    %cst_22 = arith.constant 5.120000e+02 : f32
    %68 = vector.broadcast %cst_22 : f32 to vector<8x1xf32>
    %69 = arith.divf %67, %68 : vector<8x1xf32>
    %70 = arith.mulf %65, %65 : vector<8x512xf32>
    %cst_23 = arith.constant dense<0.000000e+00> : vector<8xf32>
    %71 = vector.multi_reduction <add>, %70, %cst_23 [1] : vector<8x512xf32> to vector<8xf32>
    %72 = vector.shape_cast %71 : vector<8xf32> to vector<8x1xf32>
    %cst_24 = arith.constant 5.120000e+02 : f32
    %73 = vector.broadcast %cst_24 : f32 to vector<8x1xf32>
    %74 = arith.divf %72, %73 : vector<8x1xf32>
    %75 = arith.mulf %69, %69 : vector<8x1xf32>
    %76 = arith.subf %74, %75 : vector<8x1xf32>
    %77 = vector.extract_strided_slice %0 {offsets = [2, 0, 0], sizes = [1, 8, 1], strides = [1, 1, 1]} : vector<6x8x1xf32> to vector<1x8x1xf32>
    %78 = vector.shape_cast %77 : vector<1x8x1xf32> to vector<8x1xf32>
    %cst_25 = arith.constant 9.99999974E-6 : f32
    %79 = vector.broadcast %cst_25 : f32 to vector<8x1xf32>
    %80 = arith.addf %76, %79 : vector<8x1xf32>
    %81 = math.rsqrt %80 : vector<8x1xf32>
    %82 = arith.mulf %78, %81 : vector<8x1xf32>
    %83 = vector.extract_strided_slice %0 {offsets = [3, 0, 0], sizes = [1, 8, 1], strides = [1, 1, 1]} : vector<6x8x1xf32> to vector<1x8x1xf32>
    %84 = vector.shape_cast %83 : vector<1x8x1xf32> to vector<8x1xf32>
    %85 = arith.mulf %69, %82 : vector<8x1xf32>
    %86 = arith.subf %84, %85 : vector<8x1xf32>
    %87 = vector.broadcast %82 : vector<8x1xf32> to vector<8x512xf32>
    %88 = arith.mulf %65, %87 : vector<8x512xf32>
    %89 = vector.broadcast %86 : vector<8x1xf32> to vector<8x512xf32>
    %90 = arith.addf %88, %89 : vector<8x512xf32>
    %cst_26 = arith.constant 0.000000e+00 : f32
    %91 = vector.broadcast %cst_26 : f32 to vector<8x512xf32>
    %92 = arith.maximumf %90, %91 : vector<8x512xf32>
    %c16_i32_27 = arith.constant 16 : i32
    %93 = tpu.dynamic_rotate %92 by %c16_i32_27 dim 1 : vector<8x512xf32>, i32 -> vector<8x512xf32>
    %94 = vector.broadcast %3 : vector<1x512xf32> to vector<8x512xf32>
    %95 = arith.mulf %94, %93 : vector<8x512xf32>
    %c496_i32_28 = arith.constant 496 : i32
    %96 = tpu.dynamic_rotate %92 by %c496_i32_28 dim 1 : vector<8x512xf32>, i32 -> vector<8x512xf32>
    %97 = vector.broadcast %4 : vector<1x512xf32> to vector<8x512xf32>
    %98 = arith.mulf %97, %96 : vector<8x512xf32>
    %99 = tpu.concatenate %95, %92, %98 in 0 : vector<8x512xf32>, vector<8x512xf32>, vector<8x512xf32> -> vector<24x512xf32>
    %100 = vector.extract_strided_slice %1 {offsets = [3, 0, 0], sizes = [1, 8, 24], strides = [1, 1, 1]} : vector<6x8x24xf32> to vector<1x8x24xf32>
    %101 = vector.shape_cast %100 : vector<1x8x24xf32> to vector<8x24xf32>
    %cst_29 = arith.constant dense<0.000000e+00> : vector<8x512xf32>
    %102 = tpu.matmul %101, %99, %cst_29 {dimension_numbers = #tpu.dot_dimension_numbers<[1], [0], [0], [1], [0, 0, 1, 1], [], []>} : vector<8x24xf32>, vector<24x512xf32>, vector<8x512xf32> -> vector<8x512xf32>
    %103 = vector.extract_strided_slice %1 {offsets = [4, 0, 0], sizes = [1, 8, 24], strides = [1, 1, 1]} : vector<6x8x24xf32> to vector<1x8x24xf32>
    %104 = vector.shape_cast %103 : vector<1x8x24xf32> to vector<8x24xf32>
    %cst_30 = arith.constant dense<0.000000e+00> : vector<8x512xf32>
    %105 = tpu.matmul %104, %99, %cst_30 {dimension_numbers = #tpu.dot_dimension_numbers<[1], [0], [0], [1], [0, 0, 1, 1], [], []>} : vector<8x24xf32>, vector<24x512xf32>, vector<8x512xf32> -> vector<8x512xf32>
    %106 = vector.extract_strided_slice %1 {offsets = [5, 0, 0], sizes = [1, 8, 24], strides = [1, 1, 1]} : vector<6x8x24xf32> to vector<1x8x24xf32>
    %107 = vector.shape_cast %106 : vector<1x8x24xf32> to vector<8x24xf32>
    %cst_31 = arith.constant dense<0.000000e+00> : vector<8x512xf32>
    %108 = tpu.matmul %107, %99, %cst_31 {dimension_numbers = #tpu.dot_dimension_numbers<[1], [0], [0], [1], [0, 0, 1, 1], [], []>} : vector<8x24xf32>, vector<24x512xf32>, vector<8x512xf32> -> vector<8x512xf32>
    %c1_i32_32 = arith.constant 1 : i32
    %109 = tpu.dynamic_rotate %102 by %c1_i32_32 dim 1 : vector<8x512xf32>, i32 -> vector<8x512xf32>
    %110 = vector.broadcast %5 : vector<1x512xf32> to vector<8x512xf32>
    %111 = arith.mulf %110, %109 : vector<8x512xf32>
    %112 = arith.addf %105, %111 : vector<8x512xf32>
    %c511_i32_33 = arith.constant 511 : i32
    %113 = tpu.dynamic_rotate %108 by %c511_i32_33 dim 1 : vector<8x512xf32>, i32 -> vector<8x512xf32>
    %114 = vector.broadcast %6 : vector<1x512xf32> to vector<8x512xf32>
    %115 = arith.mulf %114, %113 : vector<8x512xf32>
    %116 = arith.addf %112, %115 : vector<8x512xf32>
    %cst_34 = arith.constant dense<0.000000e+00> : vector<8xf32>
    %117 = vector.multi_reduction <add>, %116, %cst_34 [1] : vector<8x512xf32> to vector<8xf32>
    %118 = vector.shape_cast %117 : vector<8xf32> to vector<8x1xf32>
    %cst_35 = arith.constant 5.120000e+02 : f32
    %119 = vector.broadcast %cst_35 : f32 to vector<8x1xf32>
    %120 = arith.divf %118, %119 : vector<8x1xf32>
    %121 = arith.mulf %116, %116 : vector<8x512xf32>
    %cst_36 = arith.constant dense<0.000000e+00> : vector<8xf32>
    %122 = vector.multi_reduction <add>, %121, %cst_36 [1] : vector<8x512xf32> to vector<8xf32>
    %123 = vector.shape_cast %122 : vector<8xf32> to vector<8x1xf32>
    %cst_37 = arith.constant 5.120000e+02 : f32
    %124 = vector.broadcast %cst_37 : f32 to vector<8x1xf32>
    %125 = arith.divf %123, %124 : vector<8x1xf32>
    %126 = arith.mulf %120, %120 : vector<8x1xf32>
    %127 = arith.subf %125, %126 : vector<8x1xf32>
    %128 = vector.extract_strided_slice %0 {offsets = [4, 0, 0], sizes = [1, 8, 1], strides = [1, 1, 1]} : vector<6x8x1xf32> to vector<1x8x1xf32>
    %129 = vector.shape_cast %128 : vector<1x8x1xf32> to vector<8x1xf32>
    %cst_38 = arith.constant 9.99999974E-6 : f32
    %130 = vector.broadcast %cst_38 : f32 to vector<8x1xf32>
    %131 = arith.addf %127, %130 : vector<8x1xf32>
    %132 = math.rsqrt %131 : vector<8x1xf32>
    %133 = arith.mulf %129, %132 : vector<8x1xf32>
    %134 = vector.extract_strided_slice %0 {offsets = [5, 0, 0], sizes = [1, 8, 1], strides = [1, 1, 1]} : vector<6x8x1xf32> to vector<1x8x1xf32>
    %135 = vector.shape_cast %134 : vector<1x8x1xf32> to vector<8x1xf32>
    %136 = arith.mulf %120, %133 : vector<8x1xf32>
    %137 = arith.subf %135, %136 : vector<8x1xf32>
    %138 = vector.broadcast %133 : vector<8x1xf32> to vector<8x512xf32>
    %139 = arith.mulf %116, %138 : vector<8x512xf32>
    %140 = vector.broadcast %137 : vector<8x1xf32> to vector<8x512xf32>
    %141 = arith.addf %139, %140 : vector<8x512xf32>
    %cst_39 = arith.constant 0.000000e+00 : f32
    %142 = vector.broadcast %cst_39 : f32 to vector<8x512xf32>
    %143 = arith.maximumf %141, %142 : vector<8x512xf32>
    %144 = vector.extract_strided_slice %143 {offsets = [0, 0], sizes = [8, 256], strides = [1, 1]} : vector<8x512xf32> to vector<8x256xf32>
    %c0_40 = arith.constant 0 : index
    %c0_41 = arith.constant 0 : index
    %c0_42 = arith.constant 0 : index
    %145 = vector.load %arg5[%c0_40, %c0_41, %c0_42] : memref<2x8x256xf32, #tpu.memory_space<vmem>>, vector<1x8x256xf32>
    %146 = vector.shape_cast %145 : vector<1x8x256xf32> to vector<8x256xf32>
    %147 = vector.shape_cast %144 : vector<8x256xf32> to vector<1x8x256xf32>
    tpu.vector_store %arg5[%c0_40, %c0_41, %c0_42], %147 {strides = array<i32>} : memref<2x8x256xf32, #tpu.memory_space<vmem>>, vector<1x8x256xf32>,
    %148 = vector.extract_strided_slice %143 {offsets = [0, 256], sizes = [8, 256], strides = [1, 1]} : vector<8x512xf32> to vector<8x256xf32>
    %c1 = arith.constant 1 : index
    %c0_43 = arith.constant 0 : index
    %c0_44 = arith.constant 0 : index
    %149 = vector.load %arg5[%c1, %c0_43, %c0_44] : memref<2x8x256xf32, #tpu.memory_space<vmem>>, vector<1x8x256xf32>
    %150 = vector.shape_cast %149 : vector<1x8x256xf32> to vector<8x256xf32>
    %151 = vector.shape_cast %148 : vector<8x256xf32> to vector<1x8x256xf32>
    tpu.vector_store %arg5[%c1, %c0_43, %c0_44], %151 {strides = array<i32>} : memref<2x8x256xf32, #tpu.memory_space<vmem>>, vector<1x8x256xf32>,
    return
  }
}

</mosaic_0001>

<llo_original>
// kernel: conv_reg_forward.1
$region0: #{conv_reg_forward.1}
  #allocation0 [shape = 'u32[]', space=smem, size = 0x4, offset = 0x4, fixed_abs, tag = 'smem constant byte address 0x4 - core index']
  #allocation1 [shape = 'u32[72,128]{1,0:T(1,128)}', space=vmem, size = 0x9000, scoped, tag = 'internal scratch']
  %s0 = inlined_call_operand.vmem [shape: f32[2,4,256], index: 0, kind: input, shape index: {}]
  %s1 = inlined_call_operand.vmem [shape: f32[8,4], index: 1, kind: input, shape index: {}]
  %s2 = inlined_call_operand.vmem [shape: f32[6,8,24], index: 2, kind: input, shape index: {}]
  %s3 = inlined_call_operand.vmem [shape: f32[6,8,1], index: 3, kind: input, shape index: {}]
  %s4 = inlined_call_operand.vmem [shape: f32[4,512], index: 4, kind: input, shape index: {}]
  %s5 = inlined_call_operand.vmem [shape: f32[2,8,256], index: 5, kind: output, shape index: {}]
  %s6 = sld [smem:[#allocation0]]
  $region30: #{conv_reg_forward.1} parent=0
    _
  %s8 = ssub.s32 1, %s6
  %s9 = scalar_select 0, %s8, %s6
  // Predicated region
  $region2: #{conv_reg_forward.1} parent=0 // pred_check
    _
  $region3: #{conv_reg_forward.1} parent=0 // pred_check_branch
    %11 = sbr.rel (0) target = $region5
  $region4: #{conv_reg_forward.1} parent=0 // pred_region
    _
  $region5: #{conv_reg_forward.1} parent=0 // pred_fallthru
    _
  // Predicated region
  $region6: #{conv_reg_forward.1} parent=0 // pred_check
    _
  $region7: #{conv_reg_forward.1} parent=0 // pred_check_branch
    %13 = sbr.rel (0) target = $region9
  $region8: #{conv_reg_forward.1} parent=0 // pred_region
    _
  $region9: #{conv_reg_forward.1} parent=0 // pred_fallthru
    _
  // Predicated region
  $region10: #{conv_reg_forward.1} parent=0 // pred_check
    _
  $region11: #{conv_reg_forward.1} parent=0 // pred_check_branch
    %15 = sbr.rel (0) target = $region13
  $region12: #{conv_reg_forward.1} parent=0 // pred_region
    _
  $region13: #{conv_reg_forward.1} parent=0 // pred_fallthru
    _
  // Predicated region
  $region14: #{conv_reg_forward.1} parent=0 // pred_check
    _
  $region15: #{conv_reg_forward.1} parent=0 // pred_check_branch
    %17 = sbr.rel (0) target = $region17
  $region16: #{conv_reg_forward.1} parent=0 // pred_region
    _
  $region17: #{conv_reg_forward.1} parent=0 // pred_fallthru
    _
  // Predicated region
  $region18: #{conv_reg_forward.1} parent=0 // pred_check
    _
  $region19: #{conv_reg_forward.1} parent=0 // pred_check_branch
    %19 = sbr.rel (0) target = $region21
  $region20: #{conv_reg_forward.1} parent=0 // pred_region
    _
  $region21: #{conv_reg_forward.1} parent=0 // pred_fallthru
    _
  %v20 = vld [vmem:[%s3] sm:$0xff]
  %v21 = vld [vmem:[%s3 + $0x8] sm:$0xff]
  %v22 = vld [vmem:[%s3 + $0x10] sm:$0xff]
  %v23 = vld [vmem:[%s3 + $0x18] sm:$0xff]
  %v24 = vld [vmem:[%s3 + $0x20] sm:$0xff]
  %v25 = vld [vmem:[%s3 + $0x28] sm:$0xff]
  %v26 = vld [vmem:[%s2] sm:$0xff]
  %v27 = vld [vmem:[%s2 + $0x8] sm:$0xff]
  %v28 = vld [vmem:[%s2 + $0x10] sm:$0xff]
  %v29 = vld [vmem:[%s2 + $0x18] sm:$0xff]
  %v30 = vld [vmem:[%s2 + $0x20] sm:$0xff]
  %v31 = vld [vmem:[%s2 + $0x28] sm:$0xff]
  %v32 = vld [vmem:[%s4] sm:$0xff]
  %v33 = vld [vmem:[%s4 + $0x8] sm:$0xff]
  %v34 = vld [vmem:[%s0] sm:$0xff]
  %v35 = vld [vmem:[%s0 + $0x8] sm:$0xff]
  %37 = vst [vmem:[#allocation1] ss:$2 sm:$0xff] %v34
  %v38 = vld.sshfl [vmem:[#allocation1] sm:$0xff pattern:$0x75316420]
  %v39 = vld.sshfl [vmem:[#allocation1 + $0x8] sm:$0xff pattern:$0x75316420]
  %41 = vst [vmem:[#allocation1] ss:$2 sm:$0xff] %v35
  %v42 = vld.sshfl [vmem:[#allocation1] sm:$0xff pattern:$0x75316420]
  %v43 = vld.sshfl [vmem:[#allocation1 + $0x8] sm:$0xff pattern:$0x75316420]
  %v44 = vld [vmem:[%s1] sm:$0xff]
  %vm45 = vcmask 31744
  %v47 = vsel %vm45, %v44, 0
  %vm49 = vcmask 1043456
  %v50 = vsel %vm49, %v38, 0
  %v52 = vsel %vm49, %v39, 0
  %v54 = vsel %vm49, %v42, 0
  %v56 = vsel %vm49, %v43, 0
  %58 = vmatpush.msra.mxu0 0.0
  %59 = vmatpush.msra.mxu0 0.0
  %60 = vmatpush.msra.mxu0 0.0
  %61 = vmatpush.msra.mxu0 0.0
  %62 = vmatpush.msra.mxu0 0.0
  %63 = vmatpush.msra.mxu0 0.0
  %64 = vmatpush.msra.mxu0 0.0
  %65 = vmatpush.msra.mxu0 0.0
  %66 = vmatpush.msra.mxu0 0.0
  %67 = vmatpush.msra.mxu0 0.0
  %68 = vmatpush.msra.mxu0 0.0
  %69 = vmatpush.msra.mxu0 0.0
  %70 = vmatpush.msra.mxu0 0.0
  %71 = vmatpush.msra.mxu0 0.0
  %72 = vmatpush.msra.mxu0 0.0
  %73 = vmatpush.msra.mxu0 %v50
  %74 = vmatmul.f32.gmra.mxu0 %v47
  %v75 = vpop.f32.mrf.mxu0
  %v76 = vadd.f32 0.0, %v75
  %77 = vdwg.mxu0
  %78 = vmatpush.msra.mxu0 0.0
  %79 = vmatpush.msra.mxu0 0.0
  %80 = vmatpush.msra.mxu0 0.0
  %81 = vmatpush.msra.mxu0 0.0
  %82 = vmatpush.msra.mxu0 0.0
  %83 = vmatpush.msra.mxu0 0.0
  %84 = vmatpush.msra.mxu0 0.0
  %85 = vmatpush.msra.mxu0 0.0
  %86 = vmatpush.msra.mxu0 0.0
  %87 = vmatpush.msra.mxu0 0.0
  %88 = vmatpush.msra.mxu0 0.0
  %89 = vmatpush.msra.mxu0 0.0
  %90 = vmatpush.msra.mxu0 0.0
  %91 = vmatpush.msra.mxu0 0.0
  %92 = vmatpush.msra.mxu0 0.0
  %93 = vmatpush.msra.mxu0 %v52
  %94 = vmatmul.f32.gmra.mxu0 %v47
  %v95 = vpop.f32.mrf.mxu0
  %v96 = vadd.f32 0.0, %v95
  %97 = vdwg.mxu0
  %98 = vmatpush.msra.mxu0 0.0
  %99 = vmatpush.msra.mxu0 0.0
  %100 = vmatpush.msra.mxu0 0.0
  %101 = vmatpush.msra.mxu0 0.0
  %102 = vmatpush.msra.mxu0 0.0
  %103 = vmatpush.msra.mxu0 0.0
  %104 = vmatpush.msra.mxu0 0.0
  %105 = vmatpush.msra.mxu0 0.0
  %106 = vmatpush.msra.mxu0 0.0
  %107 = vmatpush.msra.mxu0 0.0
  %108 = vmatpush.msra.mxu0 0.0
  %109 = vmatpush.msra.mxu0 0.0
  %110 = vmatpush.msra.mxu0 0.0
  %111 = vmatpush.msra.mxu0 0.0
  %112 = vmatpush.msra.mxu0 0.0
  %113 = vmatpush.msra.mxu0 %v54
  %114 = vmatmul.f32.gmra.mxu0 %v47
  %v115 = vpop.f32.mrf.mxu0
  %v116 = vadd.f32 0.0, %v115
  %117 = vdwg.mxu0
  %118 = vmatpush.msra.mxu0 0.0
  %119 = vmatpush.msra.mxu0 0.0
  %120 = vmatpush.msra.mxu0 0.0
  %121 = vmatpush.msra.mxu0 0.0
  %122 = vmatpush.msra.mxu0 0.0
  %123 = vmatpush.msra.mxu0 0.0
  %124 = vmatpush.msra.mxu0 0.0
  %125 = vmatpush.msra.mxu0 0.0
  %126 = vmatpush.msra.mxu0 0.0
  %127 = vmatpush.msra.mxu0 0.0
  %128 = vmatpush.msra.mxu0 0.0
  %129 = vmatpush.msra.mxu0 0.0
  %130 = vmatpush.msra.mxu0 0.0
  %131 = vmatpush.msra.mxu0 0.0
  %132 = vmatpush.msra.mxu0 0.0
  %133 = vmatpush.msra.mxu0 %v56
  %134 = vmatmul.f32.gmra.mxu0 %v47
  %v135 = vpop.f32.mrf.mxu0
  %v136 = vadd.f32 0.0, %v135
  %137 = vdwg.mxu0
  %v138 = vadd.f32 %v76, %v96
  %v139 = vadd.f32 %v138, %v116
  %v140 = vadd.f32 %v139, %v136
  %141 = vadd.xlane.f32.xlu0 %v140
  %v142 = vpop.xlane.xlu0 %141
  %v143 = vrcp.pop 512.0
  %v144 = vmul.f32 512.0, %v143
  %v145 = vsub.f32 1.0, %v144
  %v146 = vmul.f32 %v143, %v145
  %v147 = vadd.f32 %v143, %v146
  %vm148 = vweird.f32 %v143
  %v149 = vsel %vm148, %v143, %v147
  %v150 = vmul.f32 %v142, %v149
  %v151 = vmul.f32 %v76, %v76
  %v152 = vmul.f32 %v96, %v96
  %v153 = vmul.f32 %v116, %v116
  %v154 = vmul.f32 %v136, %v136
  %v155 = vadd.f32 %v151, %v152
  %v156 = vadd.f32 %v155, %v153
  %v157 = vadd.f32 %v156, %v154
  %158 = vadd.xlane.f32.xlu0 %v157
  %v159 = vpop.xlane.xlu0 %158
  %v160 = vmul.f32 %v159, %v149
  %v161 = vmul.f32 %v150, %v150
  %v162 = vsub.f32 %v160, %v161
  %v163 = vadd.f32 %v162, 1e-05
  %v164 = vrsqrt.pop %v163
  %v165 = vmul.f32 %v164, %v163
  %v166 = vmul.f32 %v165, %v164
  %v167 = vmul.f32 0.5, %v166
  %v168 = vsub.f32 1.5, %v167
  %v169 = vmul.f32 %v164, %v168
  %vm170 = vweird.f32 %v163
  %vm171 = vweird.f32 %v164
  %vm172 = vmor %vm170, %vm171
  %v173 = vsel %vm172, %v164, %v169
  %v174 = vmul.f32 %v20, %v173
  %v175 = vmul.f32 %v150, %v174
  %v176 = vsub.f32 %v21, %v175
  %178 = vset.pattern.permute.xlu0 0
  %179 = vperm.xlu0 %178, %v174
  %v180 = vpop.permute.xlu0 %179
  %v182 = vmul.f32 %v76, %v180
  %v183 = vmul.f32 %v96, %v180
  %v184 = vmul.f32 %v116, %v180
  %v185 = vmul.f32 %v136, %v180
  %187 = vset.pattern.permute.xlu0 0
  %188 = vperm.xlu0 %187, %v176
  %v189 = vpop.permute.xlu0 %188
  %v191 = vadd.f32 %v182, %v189
  %v192 = vadd.f32 %v183, %v189
  %v193 = vadd.f32 %v184, %v189
  %v194 = vadd.f32 %v185, %v189
  %v195 = vmax.f32 %v191, 0.0
  %v196 = vmax.f32 %v192, 0.0
  %v197 = vmax.f32 %v193, 0.0
  %v198 = vmax.f32 %v194, 0.0
  %199 = vrot.lane.b32.xlu0 %v195, 16
  %v200 = vpop.permute.xlu0 %199
  %201 = vrot.lane.b32.xlu0 %v196, 16
  %v202 = vpop.permute.xlu0 %201
  %203 = vrot.lane.b32.xlu0 %v197, 16
  %v204 = vpop.permute.xlu0 %203
  %205 = vrot.lane.b32.xlu0 %v198, 16
  %v206 = vpop.permute.xlu0 %205
  %v207 = vlaneseq
  %v208 = vand.u32 %v207, 127
  %vm209 = vcmp.lt.s32.totalorder %v208, 16
  %v210 = vsel %vm209, %v204, %v206
  %v211 = vsel %vm209, %v202, %v204
  %v212 = vsel %vm209, %v200, %v202
  %v213 = vsel %vm209, %v206, %v200
  %v216 = vperm.slane %v32, 0
  %v217 = vperm.slane %v32, 4
  %v218 = vperm.slane %v33, 0
  %v219 = vperm.slane %v33, 4
  %v224 = vperm.slane %v216, 0
  %v225 = vperm.slane %v217, 0
  %v226 = vperm.slane %v218, 0
  %v227 = vperm.slane %v219, 0
  %v228 = vmul.f32 %v224, %v213
  %v229 = vmul.f32 %v225, %v212
  %v230 = vmul.f32 %v226, %v211
  %v231 = vmul.f32 %v227, %v210
  %232 = vrot.lane.b32.xlu0 %v195, 112
  %v233 = vpop.permute.xlu0 %232
  %234 = vrot.lane.b32.xlu0 %v196, 112
  %v235 = vpop.permute.xlu0 %234
  %236 = vrot.lane.b32.xlu0 %v197, 112
  %v237 = vpop.permute.xlu0 %236
  %238 = vrot.lane.b32.xlu0 %v198, 112
  %v239 = vpop.permute.xlu0 %238
  %vm240 = vcmp.lt.s32.totalorder %v208, 112
  %v241 = vsel %vm240, %v237, %v239
  %v242 = vsel %vm240, %v235, %v237
  %v243 = vsel %vm240, %v233, %v235
  %v244 = vsel %vm240, %v239, %v233
  %v245 = vperm.slane %v32, 1
  %v246 = vperm.slane %v32, 5
  %v247 = vperm.slane %v33, 1
  %v248 = vperm.slane %v33, 5
  %v253 = vperm.slane %v245, 1
  %v254 = vperm.slane %v246, 1
  %v255 = vperm.slane %v247, 1
  %v256 = vperm.slane %v248, 1
  %v257 = vmul.f32 %v253, %v243
  %v258 = vmul.f32 %v254, %v242
  %v259 = vmul.f32 %v255, %v241
  %v260 = vmul.f32 %v256, %v244
  %vm261 = vcmask 195584
  %v263 = vsel %vm261, %v26, 0
  %265 = vmatpush.msra.mxu0 0.0
  %266 = vmatpush.msra.mxu0 0.0
  %267 = vmatpush.msra.mxu0 0.0
  %268 = vmatpush.msra.mxu0 0.0
  %269 = vmatpush.msra.mxu0 0.0
  %270 = vmatpush.msra.mxu0 0.0
  %271 = vmatpush.msra.mxu0 0.0
  %272 = vmatpush.msra.mxu0 0.0
  %273 = vmatpush.msra.mxu0 0.0
  %274 = vmatpush.msra.mxu0 0.0
  %275 = vmatpush.msra.mxu0 0.0
  %276 = vmatpush.msra.mxu0 0.0
  %277 = vmatpush.msra.mxu0 0.0
  %278 = vmatpush.msra.mxu0 %v257
  %279 = vmatpush.msra.mxu0 %v195
  %280 = vmatpush.msra.mxu0 %v228
  %281 = vmatmul.f32.gmra.mxu0 %v263
  %v282 = vpop.f32.mrf.mxu0
  %v283 = vadd.f32 0.0, %v282
  %284 = vdwg.mxu0
  %285 = vmatpush.msra.mxu0 0.0
  %286 = vmatpush.msra.mxu0 0.0
  %287 = vmatpush.msra.mxu0 0.0
  %288 = vmatpush.msra.mxu0 0.0
  %289 = vmatpush.msra.mxu0 0.0
  %290 = vmatpush.msra.mxu0 0.0
  %291 = vmatpush.msra.mxu0 0.0
  %292 = vmatpush.msra.mxu0 0.0
  %293 = vmatpush.msra.mxu0 0.0
  %294 = vmatpush.msra.mxu0 0.0
  %295 = vmatpush.msra.mxu0 0.0
  %296 = vmatpush.msra.mxu0 0.0
  %297 = vmatpush.msra.mxu0 0.0
  %298 = vmatpush.msra.mxu0 %v258
  %299 = vmatpush.msra.mxu0 %v196
  %300 = vmatpush.msra.mxu0 %v229
  %301 = vmatmul.f32.gmra.mxu0 %v263
  %v302 = vpop.f32.mrf.mxu0
  %v303 = vadd.f32 0.0, %v302
  %304 = vdwg.mxu0
  %305 = vmatpush.msra.mxu0 0.0
  %306 = vmatpush.msra.mxu0 0.0
  %307 = vmatpush.msra.mxu0 0.0
  %308 = vmatpush.msra.mxu0 0.0
  %309 = vmatpush.msra.mxu0 0.0
  %310 = vmatpush.msra.mxu0 0.0
  %311 = vmatpush.msra.mxu0 0.0
  %312 = vmatpush.msra.mxu0 0.0
  %313 = vmatpush.msra.mxu0 0.0
  %314 = vmatpush.msra.mxu0 0.0
  %315 = vmatpush.msra.mxu0 0.0
  %316 = vmatpush.msra.mxu0 0.0
  %317 = vmatpush.msra.mxu0 0.0
  %318 = vmatpush.msra.mxu0 %v259
  %319 = vmatpush.msra.mxu0 %v197
  %320 = vmatpush.msra.mxu0 %v230
  %321 = vmatmul.f32.gmra.mxu0 %v263
  %v322 = vpop.f32.mrf.mxu0
  %v323 = vadd.f32 0.0, %v322
  %324 = vdwg.mxu0
  %325 = vmatpush.msra.mxu0 0.0
  %326 = vmatpush.msra.mxu0 0.0
  %327 = vmatpush.msra.mxu0 0.0
  %328 = vmatpush.msra.mxu0 0.0
  %329 = vmatpush.msra.mxu0 0.0
  %330 = vmatpush.msra.mxu0 0.0
  %331 = vmatpush.msra.mxu0 0.0
  %332 = vmatpush.msra.mxu0 0.0
  %333 = vmatpush.msra.mxu0 0.0
  %334 = vmatpush.msra.mxu0 0.0
  %335 = vmatpush.msra.mxu0 0.0
  %336 = vmatpush.msra.mxu0 0.0
  %337 = vmatpush.msra.mxu0 0.0
  %338 = vmatpush.msra.mxu0 %v260
  %339 = vmatpush.msra.mxu0 %v198
  %340 = vmatpush.msra.mxu0 %v231
  %341 = vmatmul.f32.gmra.mxu0 %v263
  %v342 = vpop.f32.mrf.mxu0
  %v343 = vadd.f32 0.0, %v342
  %344 = vdwg.mxu0
  %v346 = vsel %vm261, %v28, 0
  %348 = vmatpush.msra.mxu0 0.0
  %349 = vmatpush.msra.mxu0 0.0
  %350 = vmatpush.msra.mxu0 0.0
  %351 = vmatpush.msra.mxu0 0.0
  %352 = vmatpush.msra.mxu0 0.0
  %353 = vmatpush.msra.mxu0 0.0
  %354 = vmatpush.msra.mxu0 0.0
  %355 = vmatpush.msra.mxu0 0.0
  %356 = vmatpush.msra.mxu0 0.0
  %357 = vmatpush.msra.mxu0 0.0
  %358 = vmatpush.msra.mxu0 0.0
  %359 = vmatpush.msra.mxu0 0.0
  %360 = vmatpush.msra.mxu0 0.0
  %361 = vmatpush.msra.mxu0 %v257
  %362 = vmatpush.msra.mxu0 %v195
  %363 = vmatpush.msra.mxu0 %v228
  %364 = vmatmul.f32.gmra.mxu0 %v346
  %v365 = vpop.f32.mrf.mxu0
  %v366 = vadd.f32 0.0, %v365
  %367 = vdwg.mxu0
  %368 = vmatpush.msra.mxu0 0.0
  %369 = vmatpush.msra.mxu0 0.0
  %370 = vmatpush.msra.mxu0 0.0
  %371 = vmatpush.msra.mxu0 0.0
  %372 = vmatpush.msra.mxu0 0.0
  %373 = vmatpush.msra.mxu0 0.0
  %374 = vmatpush.msra.mxu0 0.0
  %375 = vmatpush.msra.mxu0 0.0
  %376 = vmatpush.msra.mxu0 0.0
  %377 = vmatpush.msra.mxu0 0.0
  %378 = vmatpush.msra.mxu0 0.0
  %379 = vmatpush.msra.mxu0 0.0
  %380 = vmatpush.msra.mxu0 0.0
  %381 = vmatpush.msra.mxu0 %v258
  %382 = vmatpush.msra.mxu0 %v196
  %383 = vmatpush.msra.mxu0 %v229
  %384 = vmatmul.f32.gmra.mxu0 %v346
  %v385 = vpop.f32.mrf.mxu0
  %v386 = vadd.f32 0.0, %v385
  %387 = vdwg.mxu0
  %388 = vmatpush.msra.mxu0 0.0
  %389 = vmatpush.msra.mxu0 0.0
  %390 = vmatpush.msra.mxu0 0.0
  %391 = vmatpush.msra.mxu0 0.0
  %392 = vmatpush.msra.mxu0 0.0
  %393 = vmatpush.msra.mxu0 0.0
  %394 = vmatpush.msra.mxu0 0.0
  %395 = vmatpush.msra.mxu0 0.0
  %396 = vmatpush.msra.mxu0 0.0
  %397 = vmatpush.msra.mxu0 0.0
  %398 = vmatpush.msra.mxu0 0.0
  %399 = vmatpush.msra.mxu0 0.0
  %400 = vmatpush.msra.mxu0 0.0
  %401 = vmatpush.msra.mxu0 %v259
  %402 = vmatpush.msra.mxu0 %v197
  %403 = vmatpush.msra.mxu0 %v230
  %404 = vmatmul.f32.gmra.mxu0 %v346
  %v405 = vpop.f32.mrf.mxu0
  %v406 = vadd.f32 0.0, %v405
  %407 = vdwg.mxu0
  %408 = vmatpush.msra.mxu0 0.0
  %409 = vmatpush.msra.mxu0 0.0
  %410 = vmatpush.msra.mxu0 0.0
  %411 = vmatpush.msra.mxu0 0.0
  %412 = vmatpush.msra.mxu0 0.0
  %413 = vmatpush.msra.mxu0 0.0
  %414 = vmatpush.msra.mxu0 0.0
  %415 = vmatpush.msra.mxu0 0.0
  %416 = vmatpush.msra.mxu0 0.0
  %417 = vmatpush.msra.mxu0 0.0
  %418 = vmatpush.msra.mxu0 0.0
  %419 = vmatpush.msra.mxu0 0.0
  %420 = vmatpush.msra.mxu0 0.0
  %421 = vmatpush.msra.mxu0 %v260
  %422 = vmatpush.msra.mxu0 %v198
  %423 = vmatpush.msra.mxu0 %v231
  %424 = vmatmul.f32.gmra.mxu0 %v346
  %v425 = vpop.f32.mrf.mxu0
  %v426 = vadd.f32 0.0, %v425
  %427 = vdwg.mxu0
  %428 = vrot.lane.b32.xlu0 %v283, 1
  %v429 = vpop.permute.xlu0 %428
  %430 = vrot.lane.b32.xlu0 %v303, 1
  %v431 = vpop.permute.xlu0 %430
  %432 = vrot.lane.b32.xlu0 %v323, 1
  %v433 = vpop.permute.xlu0 %432
  %434 = vrot.lane.b32.xlu0 %v343, 1
  %v435 = vpop.permute.xlu0 %434
  %vm436 = vcmp.lt.s32.totalorder %v208, 1
  %v437 = vsel %vm436, %v433, %v435
  %v438 = vsel %vm436, %v431, %v433
  %v439 = vsel %vm436, %v429, %v431
  %v440 = vsel %vm436, %v435, %v429
  %v441 = vperm.slane %v32, 2
  %v442 = vperm.slane %v32, 6
  %v443 = vperm.slane %v33, 2
  %v444 = vperm.slane %v33, 6
  %v449 = vperm.slane %v441, 2
  %v450 = vperm.slane %v442, 2
  %v451 = vperm.slane %v443, 2
  %v452 = vperm.slane %v444, 2
  %v453 = vmul.f32 %v449, %v440
  %v454 = vmul.f32 %v450, %v439
  %v455 = vmul.f32 %v451, %v438
  %v456 = vmul.f32 %v452, %v437
  %v458 = vsel %vm261, %v27, 0
  %460 = vmatpush.msra.mxu0 0.0
  %461 = vmatpush.msra.mxu0 0.0
  %462 = vmatpush.msra.mxu0 0.0
  %463 = vmatpush.msra.mxu0 0.0
  %464 = vmatpush.msra.mxu0 0.0
  %465 = vmatpush.msra.mxu0 0.0
  %466 = vmatpush.msra.mxu0 0.0
  %467 = vmatpush.msra.mxu0 0.0
  %468 = vmatpush.msra.mxu0 0.0
  %469 = vmatpush.msra.mxu0 0.0
  %470 = vmatpush.msra.mxu0 0.0
  %471 = vmatpush.msra.mxu0 0.0
  %472 = vmatpush.msra.mxu0 0.0
  %473 = vmatpush.msra.mxu0 %v257
  %474 = vmatpush.msra.mxu0 %v195
  %475 = vmatpush.msra.mxu0 %v228
  %476 = vmatmul.f32.gmra.mxu0 %v458
  %v477 = vpop.f32.mrf.mxu0
  %v478 = vadd.f32 %v453, %v477
  %479 = vdwg.mxu0
  %480 = vmatpush.msra.mxu0 0.0
  %481 = vmatpush.msra.mxu0 0.0
  %482 = vmatpush.msra.mxu0 0.0
  %483 = vmatpush.msra.mxu0 0.0
  %484 = vmatpush.msra.mxu0 0.0
  %485 = vmatpush.msra.mxu0 0.0
  %486 = vmatpush.msra.mxu0 0.0
  %487 = vmatpush.msra.mxu0 0.0
  %488 = vmatpush.msra.mxu0 0.0
  %489 = vmatpush.msra.mxu0 0.0
  %490 = vmatpush.msra.mxu0 0.0
  %491 = vmatpush.msra.mxu0 0.0
  %492 = vmatpush.msra.mxu0 0.0
  %493 = vmatpush.msra.mxu0 %v258
  %494 = vmatpush.msra.mxu0 %v196
  %495 = vmatpush.msra.mxu0 %v229
  %496 = vmatmul.f32.gmra.mxu0 %v458
  %v497 = vpop.f32.mrf.mxu0
  %v498 = vadd.f32 %v454, %v497
  %499 = vdwg.mxu0
  %500 = vmatpush.msra.mxu0 0.0
  %501 = vmatpush.msra.mxu0 0.0
  %502 = vmatpush.msra.mxu0 0.0
  %503 = vmatpush.msra.mxu0 0.0
  %504 = vmatpush.msra.mxu0 0.0
  %505 = vmatpush.msra.mxu0 0.0
  %506 = vmatpush.msra.mxu0 0.0
  %507 = vmatpush.msra.mxu0 0.0
  %508 = vmatpush.msra.mxu0 0.0
  %509 = vmatpush.msra.mxu0 0.0
  %510 = vmatpush.msra.mxu0 0.0
  %511 = vmatpush.msra.mxu0 0.0
  %512 = vmatpush.msra.mxu0 0.0
  %513 = vmatpush.msra.mxu0 %v259
  %514 = vmatpush.msra.mxu0 %v197
  %515 = vmatpush.msra.mxu0 %v230
  %516 = vmatmul.f32.gmra.mxu0 %v458
  %v517 = vpop.f32.mrf.mxu0
  %v518 = vadd.f32 %v455, %v517
  %519 = vdwg.mxu0
  %520 = vmatpush.msra.mxu0 0.0
  %521 = vmatpush.msra.mxu0 0.0
  %522 = vmatpush.msra.mxu0 0.0
  %523 = vmatpush.msra.mxu0 0.0
  %524 = vmatpush.msra.mxu0 0.0
  %525 = vmatpush.msra.mxu0 0.0
  %526 = vmatpush.msra.mxu0 0.0
  %527 = vmatpush.msra.mxu0 0.0
  %528 = vmatpush.msra.mxu0 0.0
  %529 = vmatpush.msra.mxu0 0.0
  %530 = vmatpush.msra.mxu0 0.0
  %531 = vmatpush.msra.mxu0 0.0
  %532 = vmatpush.msra.mxu0 0.0
  %533 = vmatpush.msra.mxu0 %v260
  %534 = vmatpush.msra.mxu0 %v198
  %535 = vmatpush.msra.mxu0 %v231
  %536 = vmatmul.f32.gmra.mxu0 %v458
  %v537 = vpop.f32.mrf.mxu0
  %v538 = vadd.f32 %v456, %v537
  %539 = vdwg.mxu0
  %540 = vrot.lane.b32.xlu0 %v366, 127
  %v541 = vpop.permute.xlu0 %540
  %542 = vrot.lane.b32.xlu0 %v386, 127
  %v543 = vpop.permute.xlu0 %542
  %544 = vrot.lane.b32.xlu0 %v406, 127
  %v545 = vpop.permute.xlu0 %544
  %546 = vrot.lane.b32.xlu0 %v426, 127
  %v547 = vpop.permute.xlu0 %546
  %vm548 = vcmp.lt.s32.totalorder %v208, 127
  %v549 = vsel %vm548, %v545, %v547
  %v550 = vsel %vm548, %v543, %v545
  %v551 = vsel %vm548, %v541, %v543
  %v552 = vsel %vm548, %v547, %v541
  %v553 = vperm.slane %v32, 3
  %v554 = vperm.slane %v32, 7
  %v555 = vperm.slane %v33, 3
  %v556 = vperm.slane %v33, 7
  %v561 = vperm.slane %v553, 3
  %v562 = vperm.slane %v554, 3
  %v563 = vperm.slane %v555, 3
  %v564 = vperm.slane %v556, 3
  %v565 = vmul.f32 %v561, %v551
  %v566 = vmul.f32 %v562, %v550
  %v567 = vmul.f32 %v563, %v549
  %v568 = vmul.f32 %v564, %v552
  %v569 = vadd.f32 %v478, %v565
  %v570 = vadd.f32 %v498, %v566
  %v571 = vadd.f32 %v518, %v567
  %v572 = vadd.f32 %v538, %v568
  %v573 = vadd.f32 %v569, %v570
  %v574 = vadd.f32 %v573, %v571
  %v575 = vadd.f32 %v574, %v572
  %576 = vadd.xlane.f32.xlu0 %v575
  %v577 = vpop.xlane.xlu0 %576
  %v578 = vmul.f32 %v577, %v149
  %v579 = vmul.f32 %v569, %v569
  %v580 = vmul.f32 %v570, %v570
  %v581 = vmul.f32 %v571, %v571
  %v582 = vmul.f32 %v572, %v572
  %v583 = vadd.f32 %v579, %v580
  %v584 = vadd.f32 %v583, %v581
  %v585 = vadd.f32 %v584, %v582
  %586 = vadd.xlane.f32.xlu0 %v585
  %v587 = vpop.xlane.xlu0 %586
  %v588 = vmul.f32 %v587, %v149
  %v589 = vmul.f32 %v578, %v578
  %v590 = vsub.f32 %v588, %v589
  %v591 = vadd.f32 %v590, 1e-05
  %v592 = vrsqrt.pop %v591
  %v593 = vmul.f32 %v592, %v591
  %v594 = vmul.f32 %v593, %v592
  %v595 = vmul.f32 0.5, %v594
  %v596 = vsub.f32 1.5, %v595
  %v597 = vmul.f32 %v592, %v596
  %vm598 = vweird.f32 %v591
  %vm599 = vweird.f32 %v592
  %vm600 = vmor %vm598, %vm599
  %v601 = vsel %vm600, %v592, %v597
  %v602 = vmul.f32 %v22, %v601
  %v603 = vmul.f32 %v578, %v602
  %v604 = vsub.f32 %v23, %v603
  %606 = vset.pattern.permute.xlu0 0
  %607 = vperm.xlu0 %606, %v602
  %v608 = vpop.permute.xlu0 %607
  %v610 = vmul.f32 %v569, %v608
  %v611 = vmul.f32 %v570, %v608
  %v612 = vmul.f32 %v571, %v608
  %v613 = vmul.f32 %v572, %v608
  %615 = vset.pattern.permute.xlu0 0
  %616 = vperm.xlu0 %615, %v604
  %v617 = vpop.permute.xlu0 %616
  %v619 = vadd.f32 %v610, %v617
  %v620 = vadd.f32 %v611, %v617
  %v621 = vadd.f32 %v612, %v617
  %v622 = vadd.f32 %v613, %v617
  %v623 = vmax.f32 %v619, 0.0
  %v624 = vmax.f32 %v620, 0.0
  %v625 = vmax.f32 %v621, 0.0
  %v626 = vmax.f32 %v622, 0.0
  %627 = vrot.lane.b32.xlu0 %v623, 16
  %v628 = vpop.permute.xlu0 %627
  %629 = vrot.lane.b32.xlu0 %v624, 16
  %v630 = vpop.permute.xlu0 %629
  %631 = vrot.lane.b32.xlu0 %v625, 16
  %v632 = vpop.permute.xlu0 %631
  %633 = vrot.lane.b32.xlu0 %v626, 16
  %v634 = vpop.permute.xlu0 %633
  %v635 = vsel %vm209, %v632, %v634
  %v636 = vsel %vm209, %v630, %v632
  %v637 = vsel %vm209, %v628, %v630
  %v638 = vsel %vm209, %v634, %v628
  %v639 = vmul.f32 %v224, %v638
  %v640 = vmul.f32 %v225, %v637
  %v641 = vmul.f32 %v226, %v636
  %v642 = vmul.f32 %v227, %v635
  %643 = vrot.lane.b32.xlu0 %v623, 112
  %v644 = vpop.permute.xlu0 %643
  %645 = vrot.lane.b32.xlu0 %v624, 112
  %v646 = vpop.permute.xlu0 %645
  %647 = vrot.lane.b32.xlu0 %v625, 112
  %v648 = vpop.permute.xlu0 %647
  %649 = vrot.lane.b32.xlu0 %v626, 112
  %v650 = vpop.permute.xlu0 %649
  %v651 = vsel %vm240, %v648, %v650
  %v652 = vsel %vm240, %v646, %v648
  %v653 = vsel %vm240, %v644, %v646
  %v654 = vsel %vm240, %v650, %v644
  %v655 = vmul.f32 %v253, %v653
  %v656 = vmul.f32 %v254, %v652
  %v657 = vmul.f32 %v255, %v651
  %v658 = vmul.f32 %v256, %v654
  %v660 = vsel %vm261, %v29, 0
  %662 = vmatpush.msra.mxu0 0.0
  %663 = vmatpush.msra.mxu0 0.0
  %664 = vmatpush.msra.mxu0 0.0
  %665 = vmatpush.msra.mxu0 0.0
  %666 = vmatpush.msra.mxu0 0.0
  %667 = vmatpush.msra.mxu0 0.0
  %668 = vmatpush.msra.mxu0 0.0
  %669 = vmatpush.msra.mxu0 0.0
  %670 = vmatpush.msra.mxu0 0.0
  %671 = vmatpush.msra.mxu0 0.0
  %672 = vmatpush.msra.mxu0 0.0
  %673 = vmatpush.msra.mxu0 0.0
  %674 = vmatpush.msra.mxu0 0.0
  %675 = vmatpush.msra.mxu0 %v655
  %676 = vmatpush.msra.mxu0 %v623
  %677 = vmatpush.msra.mxu0 %v639
  %678 = vmatmul.f32.gmra.mxu0 %v660
  %v679 = vpop.f32.mrf.mxu0
  %v680 = vadd.f32 0.0, %v679
  %681 = vdwg.mxu0
  %682 = vmatpush.msra.mxu0 0.0
  %683 = vmatpush.msra.mxu0 0.0
  %684 = vmatpush.msra.mxu0 0.0
  %685 = vmatpush.msra.mxu0 0.0
  %686 = vmatpush.msra.mxu0 0.0
  %687 = vmatpush.msra.mxu0 0.0
  %688 = vmatpush.msra.mxu0 0.0
  %689 = vmatpush.msra.mxu0 0.0
  %690 = vmatpush.msra.mxu0 0.0
  %691 = vmatpush.msra.mxu0 0.0
  %692 = vmatpush.msra.mxu0 0.0
  %693 = vmatpush.msra.mxu0 0.0
  %694 = vmatpush.msra.mxu0 0.0
  %695 = vmatpush.msra.mxu0 %v656
  %696 = vmatpush.msra.mxu0 %v624
  %697 = vmatpush.msra.mxu0 %v640
  %698 = vmatmul.f32.gmra.mxu0 %v660
  %v699 = vpop.f32.mrf.mxu0
  %v700 = vadd.f32 0.0, %v699
  %701 = vdwg.mxu0
  %702 = vmatpush.msra.mxu0 0.0
  %703 = vmatpush.msra.mxu0 0.0
  %704 = vmatpush.msra.mxu0 0.0
  %705 = vmatpush.msra.mxu0 0.0
  %706 = vmatpush.msra.mxu0 0.0
  %707 = vmatpush.msra.mxu0 0.0
  %708 = vmatpush.msra.mxu0 0.0
  %709 = vmatpush.msra.mxu0 0.0
  %710 = vmatpush.msra.mxu0 0.0
  %711 = vmatpush.msra.mxu0 0.0
  %712 = vmatpush.msra.mxu0 0.0
  %713 = vmatpush.msra.mxu0 0.0
  %714 = vmatpush.msra.mxu0 0.0
  %715 = vmatpush.msra.mxu0 %v657
  %716 = vmatpush.msra.mxu0 %v625
  %717 = vmatpush.msra.mxu0 %v641
  %718 = vmatmul.f32.gmra.mxu0 %v660
  %v719 = vpop.f32.mrf.mxu0
  %v720 = vadd.f32 0.0, %v719
  %721 = vdwg.mxu0
  %722 = vmatpush.msra.mxu0 0.0
  %723 = vmatpush.msra.mxu0 0.0
  %724 = vmatpush.msra.mxu0 0.0
  %725 = vmatpush.msra.mxu0 0.0
  %726 = vmatpush.msra.mxu0 0.0
  %727 = vmatpush.msra.mxu0 0.0
  %728 = vmatpush.msra.mxu0 0.0
  %729 = vmatpush.msra.mxu0 0.0
  %730 = vmatpush.msra.mxu0 0.0
  %731 = vmatpush.msra.mxu0 0.0
  %732 = vmatpush.msra.mxu0 0.0
  %733 = vmatpush.msra.mxu0 0.0
  %734 = vmatpush.msra.mxu0 0.0
  %735 = vmatpush.msra.mxu0 %v658
  %736 = vmatpush.msra.mxu0 %v626
  %737 = vmatpush.msra.mxu0 %v642
  %738 = vmatmul.f32.gmra.mxu0 %v660
  %v739 = vpop.f32.mrf.mxu0
  %v740 = vadd.f32 0.0, %v739
  %741 = vdwg.mxu0
  %v743 = vsel %vm261, %v31, 0
  %745 = vmatpush.msra.mxu0 0.0
  %746 = vmatpush.msra.mxu0 0.0
  %747 = vmatpush.msra.mxu0 0.0
  %748 = vmatpush.msra.mxu0 0.0
  %749 = vmatpush.msra.mxu0 0.0
  %750 = vmatpush.msra.mxu0 0.0
  %751 = vmatpush.msra.mxu0 0.0
  %752 = vmatpush.msra.mxu0 0.0
  %753 = vmatpush.msra.mxu0 0.0
  %754 = vmatpush.msra.mxu0 0.0
  %755 = vmatpush.msra.mxu0 0.0
  %756 = vmatpush.msra.mxu0 0.0
  %757 = vmatpush.msra.mxu0 0.0
  %758 = vmatpush.msra.mxu0 %v655
  %759 = vmatpush.msra.mxu0 %v623
  %760 = vmatpush.msra.mxu0 %v639
  %761 = vmatmul.f32.gmra.mxu0 %v743
  %v762 = vpop.f32.mrf.mxu0
  %v763 = vadd.f32 0.0, %v762
  %764 = vdwg.mxu0
  %765 = vmatpush.msra.mxu0 0.0
  %766 = vmatpush.msra.mxu0 0.0
  %767 = vmatpush.msra.mxu0 0.0
  %768 = vmatpush.msra.mxu0 0.0
  %769 = vmatpush.msra.mxu0 0.0
  %770 = vmatpush.msra.mxu0 0.0
  %771 = vmatpush.msra.mxu0 0.0
  %772 = vmatpush.msra.mxu0 0.0
  %773 = vmatpush.msra.mxu0 0.0
  %774 = vmatpush.msra.mxu0 0.0
  %775 = vmatpush.msra.mxu0 0.0
  %776 = vmatpush.msra.mxu0 0.0
  %777 = vmatpush.msra.mxu0 0.0
  %778 = vmatpush.msra.mxu0 %v656
  %779 = vmatpush.msra.mxu0 %v624
  %780 = vmatpush.msra.mxu0 %v640
  %781 = vmatmul.f32.gmra.mxu0 %v743
  %v782 = vpop.f32.mrf.mxu0
  %v783 = vadd.f32 0.0, %v782
  %784 = vdwg.mxu0
  %785 = vmatpush.msra.mxu0 0.0
  %786 = vmatpush.msra.mxu0 0.0
  %787 = vmatpush.msra.mxu0 0.0
  %788 = vmatpush.msra.mxu0 0.0
  %789 = vmatpush.msra.mxu0 0.0
  %790 = vmatpush.msra.mxu0 0.0
  %791 = vmatpush.msra.mxu0 0.0
  %792 = vmatpush.msra.mxu0 0.0
  %793 = vmatpush.msra.mxu0 0.0
  %794 = vmatpush.msra.mxu0 0.0
  %795 = vmatpush.msra.mxu0 0.0
  %796 = vmatpush.msra.mxu0 0.0
  %797 = vmatpush.msra.mxu0 0.0
  %798 = vmatpush.msra.mxu0 %v657
  %799 = vmatpush.msra.mxu0 %v625
  %800 = vmatpush.msra.mxu0 %v641
  %801 = vmatmul.f32.gmra.mxu0 %v743
  %v802 = vpop.f32.mrf.mxu0
  %v803 = vadd.f32 0.0, %v802
  %804 = vdwg.mxu0
  %805 = vmatpush.msra.mxu0 0.0
  %806 = vmatpush.msra.mxu0 0.0
  %807 = vmatpush.msra.mxu0 0.0
  %808 = vmatpush.msra.mxu0 0.0
  %809 = vmatpush.msra.mxu0 0.0
  %810 = vmatpush.msra.mxu0 0.0
  %811 = vmatpush.msra.mxu0 0.0
  %812 = vmatpush.msra.mxu0 0.0
  %813 = vmatpush.msra.mxu0 0.0
  %814 = vmatpush.msra.mxu0 0.0
  %815 = vmatpush.msra.mxu0 0.0
  %816 = vmatpush.msra.mxu0 0.0
  %817 = vmatpush.msra.mxu0 0.0
  %818 = vmatpush.msra.mxu0 %v658
  %819 = vmatpush.msra.mxu0 %v626
  %820 = vmatpush.msra.mxu0 %v642
  %821 = vmatmul.f32.gmra.mxu0 %v743
  %v822 = vpop.f32.mrf.mxu0
  %v823 = vadd.f32 0.0, %v822
  %824 = vdwg.mxu0
  %825 = vrot.lane.b32.xlu0 %v680, 1
  %v826 = vpop.permute.xlu0 %825
  %827 = vrot.lane.b32.xlu0 %v700, 1
  %v828 = vpop.permute.xlu0 %827
  %829 = vrot.lane.b32.xlu0 %v720, 1
  %v830 = vpop.permute.xlu0 %829
  %831 = vrot.lane.b32.xlu0 %v740, 1
  %v832 = vpop.permute.xlu0 %831
  %v833 = vsel %vm436, %v830, %v832
  %v834 = vsel %vm436, %v828, %v830
  %v835 = vsel %vm436, %v826, %v828
  %v836 = vsel %vm436, %v832, %v826
  %v837 = vmul.f32 %v449, %v836
  %v838 = vmul.f32 %v450, %v835
  %v839 = vmul.f32 %v451, %v834
  %v840 = vmul.f32 %v452, %v833
  %v842 = vsel %vm261, %v30, 0
  %844 = vmatpush.msra.mxu0 0.0
  %845 = vmatpush.msra.mxu0 0.0
  %846 = vmatpush.msra.mxu0 0.0
  %847 = vmatpush.msra.mxu0 0.0
  %848 = vmatpush.msra.mxu0 0.0
  %849 = vmatpush.msra.mxu0 0.0
  %850 = vmatpush.msra.mxu0 0.0
  %851 = vmatpush.msra.mxu0 0.0
  %852 = vmatpush.msra.mxu0 0.0
  %853 = vmatpush.msra.mxu0 0.0
  %854 = vmatpush.msra.mxu0 0.0
  %855 = vmatpush.msra.mxu0 0.0
  %856 = vmatpush.msra.mxu0 0.0
  %857 = vmatpush.msra.mxu0 %v655
  %858 = vmatpush.msra.mxu0 %v623
  %859 = vmatpush.msra.mxu0 %v639
  %860 = vmatmul.f32.gmra.mxu0 %v842
  %v861 = vpop.f32.mrf.mxu0
  %v862 = vadd.f32 %v837, %v861
  %863 = vdwg.mxu0
  %864 = vmatpush.msra.mxu0 0.0
  %865 = vmatpush.msra.mxu0 0.0
  %866 = vmatpush.msra.mxu0 0.0
  %867 = vmatpush.msra.mxu0 0.0
  %868 = vmatpush.msra.mxu0 0.0
  %869 = vmatpush.msra.mxu0 0.0
  %870 = vmatpush.msra.mxu0 0.0
  %871 = vmatpush.msra.mxu0 0.0
  %872 = vmatpush.msra.mxu0 0.0
  %873 = vmatpush.msra.mxu0 0.0
  %874 = vmatpush.msra.mxu0 0.0
  %875 = vmatpush.msra.mxu0 0.0
  %876 = vmatpush.msra.mxu0 0.0
  %877 = vmatpush.msra.mxu0 %v656
  %878 = vmatpush.msra.mxu0 %v624
  %879 = vmatpush.msra.mxu0 %v640
  %880 = vmatmul.f32.gmra.mxu0 %v842
  %v881 = vpop.f32.mrf.mxu0
  %v882 = vadd.f32 %v838, %v881
  %883 = vdwg.mxu0
  %884 = vmatpush.msra.mxu0 0.0
  %885 = vmatpush.msra.mxu0 0.0
  %886 = vmatpush.msra.mxu0 0.0
  %887 = vmatpush.msra.mxu0 0.0
  %888 = vmatpush.msra.mxu0 0.0
  %889 = vmatpush.msra.mxu0 0.0
  %890 = vmatpush.msra.mxu0 0.0
  %891 = vmatpush.msra.mxu0 0.0
  %892 = vmatpush.msra.mxu0 0.0
  %893 = vmatpush.msra.mxu0 0.0
  %894 = vmatpush.msra.mxu0 0.0
  %895 = vmatpush.msra.mxu0 0.0
  %896 = vmatpush.msra.mxu0 0.0
  %897 = vmatpush.msra.mxu0 %v657
  %898 = vmatpush.msra.mxu0 %v625
  %899 = vmatpush.msra.mxu0 %v641
  %900 = vmatmul.f32.gmra.mxu0 %v842
  %v901 = vpop.f32.mrf.mxu0
  %v902 = vadd.f32 %v839, %v901
  %903 = vdwg.mxu0
  %904 = vmatpush.msra.mxu0 0.0
  %905 = vmatpush.msra.mxu0 0.0
  %906 = vmatpush.msra.mxu0 0.0
  %907 = vmatpush.msra.mxu0 0.0
  %908 = vmatpush.msra.mxu0 0.0
  %909 = vmatpush.msra.mxu0 0.0
  %910 = vmatpush.msra.mxu0 0.0
  %911 = vmatpush.msra.mxu0 0.0
  %912 = vmatpush.msra.mxu0 0.0
  %913 = vmatpush.msra.mxu0 0.0
  %914 = vmatpush.msra.mxu0 0.0
  %915 = vmatpush.msra.mxu0 0.0
  %916 = vmatpush.msra.mxu0 0.0
  %917 = vmatpush.msra.mxu0 %v658
  %918 = vmatpush.msra.mxu0 %v626
  %919 = vmatpush.msra.mxu0 %v642
  %920 = vmatmul.f32.gmra.mxu0 %v842
  %v921 = vpop.f32.mrf.mxu0
  %v922 = vadd.f32 %v840, %v921
  %923 = vdwg.mxu0
  %924 = vrot.lane.b32.xlu0 %v763, 127
  %v925 = vpop.permute.xlu0 %924
  %926 = vrot.lane.b32.xlu0 %v783, 127
  %v927 = vpop.permute.xlu0 %926
  %928 = vrot.lane.b32.xlu0 %v803, 127
  %v929 = vpop.permute.xlu0 %928
  %930 = vrot.lane.b32.xlu0 %v823, 127
  %v931 = vpop.permute.xlu0 %930
  %v932 = vsel %vm548, %v929, %v931
  %v933 = vsel %vm548, %v927, %v929
  %v934 = vsel %vm548, %v925, %v927
  %v935 = vsel %vm548, %v931, %v925
  %v936 = vmul.f32 %v561, %v934
  %v937 = vmul.f32 %v562, %v933
  %v938 = vmul.f32 %v563, %v932
  %v939 = vmul.f32 %v564, %v935
  %v940 = vadd.f32 %v862, %v936
  %v941 = vadd.f32 %v882, %v937
  %v942 = vadd.f32 %v902, %v938
  %v943 = vadd.f32 %v922, %v939
  %v944 = vadd.f32 %v940, %v941
  %v945 = vadd.f32 %v944, %v942
  %v946 = vadd.f32 %v945, %v943
  %947 = vadd.xlane.f32.xlu0 %v946
  %v948 = vpop.xlane.xlu0 %947
  %v949 = vmul.f32 %v948, %v149
  %v950 = vmul.f32 %v940, %v940
  %v951 = vmul.f32 %v941, %v941
  %v952 = vmul.f32 %v942, %v942
  %v953 = vmul.f32 %v943, %v943
  %v954 = vadd.f32 %v950, %v951
  %v955 = vadd.f32 %v954, %v952
  %v956 = vadd.f32 %v955, %v953
  %957 = vadd.xlane.f32.xlu0 %v956
  %v958 = vpop.xlane.xlu0 %957
  %v959 = vmul.f32 %v958, %v149
  %v960 = vmul.f32 %v949, %v949
  %v961 = vsub.f32 %v959, %v960
  %v962 = vadd.f32 %v961, 1e-05
  %v963 = vrsqrt.pop %v962
  %v964 = vmul.f32 %v963, %v962
  %v965 = vmul.f32 %v964, %v963
  %v966 = vmul.f32 0.5, %v965
  %v967 = vsub.f32 1.5, %v966
  %v968 = vmul.f32 %v963, %v967
  %vm969 = vweird.f32 %v962
  %vm970 = vweird.f32 %v963
  %vm971 = vmor %vm969, %vm970
  %v972 = vsel %vm971, %v963, %v968
  %v973 = vmul.f32 %v24, %v972
  %v974 = vmul.f32 %v949, %v973
  %v975 = vsub.f32 %v25, %v974
  %977 = vset.pattern.permute.xlu0 0
  %978 = vperm.xlu0 %977, %v973
  %v979 = vpop.permute.xlu0 %978
  %v981 = vmul.f32 %v940, %v979
  %v982 = vmul.f32 %v941, %v979
  %v983 = vmul.f32 %v942, %v979
  %v984 = vmul.f32 %v943, %v979
  %986 = vset.pattern.permute.xlu0 0
  %987 = vperm.xlu0 %986, %v975
  %v988 = vpop.permute.xlu0 %987
  %v990 = vadd.f32 %v981, %v988
  %v991 = vadd.f32 %v982, %v988
  %v992 = vadd.f32 %v983, %v988
  %v993 = vadd.f32 %v984, %v988
  %v994 = vmax.f32 %v990, 0.0
  %v995 = vmax.f32 %v991, 0.0
  %v996 = vmax.f32 %v992, 0.0
  %v997 = vmax.f32 %v993, 0.0
  %998 = vst [vmem:[%s5] sm:$0xff] %v994
  %999 = vst [vmem:[%s5 + $0x8] sm:$0xff] %v995
  %s1000 = scalar_lea.vmem %s5, 16
  %1001 = vst [vmem:[%s1000] sm:$0xff] %v996
  %1002 = vst [vmem:[%s1000 + $0x8] sm:$0xff] %v997
  // Predicated region
  $region22: #{conv_reg_forward.1} parent=0 // pred_check
    _
  $region23: #{conv_reg_forward.1} parent=0 // pred_check_branch
    %1004 = sbr.rel (0) target = $region25
  $region24: #{conv_reg_forward.1} parent=0 // pred_region
    _
  $region25: #{conv_reg_forward.1} parent=0 // pred_fallthru
    _
  // Predicated region
  $region26: #{conv_reg_forward.1} parent=0 // pred_check
    _
  $region27: #{conv_reg_forward.1} parent=0 // pred_check_branch
    %1006 = sbr.rel (0) target = $region29
  $region28: #{conv_reg_forward.1} parent=0 // pred_region
    _
  $region29: #{conv_reg_forward.1} parent=0 // pred_fallthru
    _

</llo_original>
